<compile_context>
chip_gen: v7x
topology: tpu7x:2x2x1
jax: 0.10.0
libtpu: 0.0.40
codegen_flags: <defaults>
</compile_context>

<pallas_src>
import itertools

import numpy as np
import jax
import jax.numpy as jnp
from jax.experimental import pallas as pl
from jax.experimental.pallas import tpu as pltpu


def total_degree_multi_indices(dim_in, order):
    """All multi-indices alpha in N^dim_in with sum(alpha) <= order (deterministic order)."""
    idx = [t for t in itertools.product(range(order + 1), repeat=dim_in) if sum(t) <= order]
    idx.sort(key=lambda t: (sum(t), t))
    return idx


def _round_up(n, m):
    return ((n + m - 1) // m) * m


def make_polyscaleshift_kernel(dim_in, dim_out, P, order, use_legendre):
    def kernel(x_ref, pv_ref, wet_ref, bem_ref, sel_ref, ct_ref, out_ref):
        x = x_ref[...]       # (tm, dim_in)  f32
        pv = pv_ref[...]     # (tm, P)       f32

        # ---------------- edge: Linear + parent-value contraction ----------------
        # wet_ref columns are k-major (k*dim_out + j); bias is folded into bem_ref.
        edge = jnp.dot(x, wet_ref[...], preferred_element_type=jnp.float32)   # (tm, P*dim_out)
        acc = jnp.dot(pv, bem_ref[...], preferred_element_type=jnp.float32)   # bias term (tm, dim_out)
        for k in range(P):   # P small; each pv-column broadcast appears exactly once
            acc = acc + edge[:, k * dim_out:(k + 1) * dim_out] * pv[:, k:k + 1]

        # ---------------- node: PCE ----------------
        # univariate orthogonal polynomials by 3-term recurrence, degrees 0..order
        polys = [jnp.ones_like(x)]
        if order >= 1:
            polys.append(x)
        for n in range(1, order):
            if use_legendre:
                nxt = ((2.0 * n + 1.0) * x * polys[n] - float(n) * polys[n - 1]) / float(n + 1)
            else:  # probabilists' Hermite
                nxt = x * polys[n] - float(n) * polys[n - 1]
            polys.append(nxt)

        # U[:, a*dim_in + d] = polys[a][:, d]
        u = jnp.concatenate(polys, axis=1)                                    # (tm, (order+1)*dim_in)
        # phi = prod_d (U @ S_d): per-dim one-hot selector matmuls (MXU) +
        # dim_in-1 lane-dense elementwise products, no width-1 column concat.
        phi = jnp.dot(u, sel_ref[0], preferred_element_type=jnp.float32)      # (tm, nbasis)
        for d in range(1, dim_in):
            phi = phi * jnp.dot(u, sel_ref[d], preferred_element_type=jnp.float32)

        node_func = jnp.dot(phi, ct_ref[...], preferred_element_type=jnp.float32)  # (tm, dim_out)

        out_ref[...] = acc + node_func

    return kernel


def poly_scale_shift(x, parent_vals, we_t, be, c_t, *, dim_out, num_parent_vals_in,
                     poly_order, poly_name, row_tile=256):
    """Pallas wrapper.

    we_t: (dim_in, dim_out*P) Linear weight transpose (original j-major column order)
    be:   (1, dim_out*P)      Linear bias
    c_t:  (nbasis, dim_out)   PCE coefficients
    """
    N, dim_in = x.shape
    P = num_parent_vals_in
    multi_indices = total_degree_multi_indices(dim_in, poly_order)
    nbasis = len(multi_indices)
    assert c_t.shape == (nbasis, dim_out)
    use_legendre = poly_name.lower().startswith("leg")

    # ---- one-time parameter repacking (done in the wrapper, outside the kernel) ----
    # Permute Linear output columns from j-major (j*P + k) to k-major (k*dim_out + j).
    perm = jnp.asarray([j * P + k for k in range(P) for j in range(dim_out)], dtype=jnp.int32)
    we_t_perm = we_t[:, perm]                                   # (dim_in, P*dim_out)
    be_mat = be.reshape(-1)[perm].reshape(P, dim_out)           # Be[k, j] = be[j*P + k]

    # One-hot selectors: S[d, a*dim_in + d, b] = 1 iff multi_indices[b][d] == a
    K = (poly_order + 1) * dim_in
    sel_np = np.zeros((dim_in, K, nbasis), dtype=np.float32)
    for b, alpha in enumerate(multi_indices):
        for d, a in enumerate(alpha):
            sel_np[d, a * dim_in + d, b] = 1.0
    sel = jnp.asarray(sel_np)

    # ---- row tiling / padding ----
    # TODO(synk): on v7x (64 MiB VMEM) halve row_tile or set vmem_limit_bytes; batching
    # several MFNet nodes along lanes would also make the (N, dim_out) output lane-dense.
    tm = min(_round_up(max(N, 1), 8), _round_up(row_tile, 8))
    N_pad = _round_up(N, tm)
    if N_pad != N:
        x = jnp.pad(x, ((0, N_pad - N), (0, 0)))
        parent_vals = jnp.pad(parent_vals, ((0, N_pad - N), (0, 0)))

    kernel = make_polyscaleshift_kernel(dim_in, dim_out, P, poly_order, use_legendre)

    out = pl.pallas_call(
        kernel,
        out_shape=jax.ShapeDtypeStruct((N_pad, dim_out), jnp.float32),
        grid=(N_pad // tm,),
        in_specs=[
            pl.BlockSpec((tm, dim_in), lambda i: (i, 0)),        # x: row-tiled
            pl.BlockSpec((tm, P), lambda i: (i, 0)),             # parent_vals: row-tiled
            pl.BlockSpec(we_t_perm.shape, lambda i: (0, 0)),     # weights: resident
            pl.BlockSpec(be_mat.shape, lambda i: (0, 0)),        # bias matrix: resident
            pl.BlockSpec(sel.shape, lambda i: (0, 0, 0)),        # basis selectors: resident
            pl.BlockSpec(c_t.shape, lambda i: (0, 0)),           # PCE coeffs: resident
        ],
        out_specs=pl.BlockSpec((tm, dim_out), lambda i: (i, 0)),
        compiler_params=pltpu.CompilerParams(dimension_semantics=("parallel",)),
    )(x, parent_vals, we_t_perm, be_mat, sel, c_t)
    return out[:N]


def reference_poly_scale_shift(x, parent_vals, we_t, be, c_t, *, dim_out,
                               num_parent_vals_in, poly_order, poly_name):
    """Pure-JAX reference mirroring the PyTorch forward."""
    N, dim_in = x.shape
    P = num_parent_vals_in
    edge_eval = x @ we_t + be                                    # (N, dim_out*P)
    edge_eval = edge_eval.reshape(N, dim_out, P)
    edge_func = jnp.einsum('ijk,ik->ij', edge_eval, parent_vals)

    use_legendre = poly_name.lower().startswith("leg")
    polys = [jnp.ones_like(x)]
    if poly_order >= 1:
        polys.append(x)
    for n in range(1, poly_order):
        if use_legendre:
            nxt = ((2.0 * n + 1.0) * x * polys[n] - float(n) * polys[n - 1]) / float(n + 1)
        else:
            nxt = x * polys[n] - float(n) * polys[n - 1]
        polys.append(nxt)

    cols = []
    for alpha in total_degree_multi_indices(dim_in, poly_order):
        col = jnp.ones((N,), jnp.float32)
        for d, a in enumerate(alpha):
            col = col * polys[a][:, d]
        cols.append(col)
    phi = jnp.stack(cols, axis=1)                                # (N, nbasis)
    node_func = phi @ c_t
    return edge_func + node_func


def _run_case(key, N, dim_in, dim_out, P, poly_order, poly_name, row_tile):
    nbasis = len(total_degree_multi_indices(dim_in, poly_order))
    kx, kpv, kw, kb, kc = jax.random.split(key, 5)
    x = jax.random.normal(kx, (N, dim_in), dtype=jnp.float32)
    parent_vals = jax.random.normal(kpv, (N, P), dtype=jnp.float32)
    we_t = 0.3 * jax.random.normal(kw, (dim_in, dim_out * P), dtype=jnp.float32)
    be = 0.1 * jax.random.normal(kb, (1, dim_out * P), dtype=jnp.float32)
    c_t = 0.3 * jax.random.normal(kc, (nbasis, dim_out), dtype=jnp.float32)

    out = poly_scale_shift(
        x, parent_vals, we_t, be, c_t,
        dim_out=dim_out, num_parent_vals_in=P,
        poly_order=poly_order, poly_name=poly_name, row_tile=row_tile)
    out = jax.block_until_ready(out)

    ref = reference_poly_scale_shift(
        x, parent_vals, we_t, be, c_t,
        dim_out=dim_out, num_parent_vals_in=P,
        poly_order=poly_order, poly_name=poly_name)

    assert out.shape == (N, dim_out)
    assert jnp.allclose(out, ref, atol=1e-5, rtol=1e-5), (out, ref)


if __name__ == "__main__":
    key = jax.random.PRNGKey(0)
    k1, k2 = jax.random.split(key)

    # small, module-consistent shapes (single grid step)
    _run_case(k1, N=8, dim_in=3, dim_out=5, P=4, poly_order=2,
              poly_name="Legendre", row_tile=256)

    # larger case exercising the row grid (multiple tiles + padding) and Hermite basis
    _run_case(k2, N=300, dim_in=3, dim_out=5, P=4, poly_order=3,
              poly_name="Hermite", row_tile=128)

    print("KERNEL_OK")
</pallas_src>

<mosaic_0001>
module attributes {stable_mosaic.version = 11 : i64} {
  func.func @kernel(%arg0: i32, %arg1: memref<8x3xf32, #tpu.memory_space<vmem>>, %arg2: memref<8x4xf32, #tpu.memory_space<vmem>>, %arg3: memref<3x20xf32, #tpu.memory_space<vmem>>, %arg4: memref<4x5xf32, #tpu.memory_space<vmem>>, %arg5: memref<3x9x10xf32, #tpu.memory_space<vmem>>, %arg6: memref<10x5xf32, #tpu.memory_space<vmem>>, %arg7: memref<8x5xf32, #tpu.memory_space<vmem>>) attributes {dimension_semantics = [#tpu.dimension_semantics<parallel>], iteration_bounds = array<i64: 1>, scalar_prefetch = 0 : i64, scratch_operands = 0 : i64, tpu.core_type = #tpu.core_type<tc>, window_params = [{transform_indices = @transform_0, window_bounds = array<i64: 8, 3>}, {transform_indices = @transform_1, window_bounds = array<i64: 8, 4>}, {pipeline_mode = #tpu.pipeline_mode<synchronous>, transform_indices = @transform_2, window_bounds = array<i64: 3, 20>}, {pipeline_mode = #tpu.pipeline_mode<synchronous>, transform_indices = @transform_3, window_bounds = array<i64: 4, 5>}, {pipeline_mode = #tpu.pipeline_mode<synchronous>, transform_indices = @transform_4, window_bounds = array<i64: 3, 9, 10>}, {pipeline_mode = #tpu.pipeline_mode<synchronous>, transform_indices = @transform_5, window_bounds = array<i64: 10, 5>}, {transform_indices = @transform_6, window_bounds = array<i64: 8, 5>}]} {
    %c0 = arith.constant 0 : index
    %c0_0 = arith.constant 0 : index
    %0 = vector.load %arg1[%c0, %c0_0] : memref<8x3xf32, #tpu.memory_space<vmem>>, vector<8x3xf32>
    %c0_1 = arith.constant 0 : index
    %c0_2 = arith.constant 0 : index
    %1 = vector.load %arg2[%c0_1, %c0_2] : memref<8x4xf32, #tpu.memory_space<vmem>>, vector<8x4xf32>
    %c0_3 = arith.constant 0 : index
    %c0_4 = arith.constant 0 : index
    %2 = vector.load %arg3[%c0_3, %c0_4] : memref<3x20xf32, #tpu.memory_space<vmem>>, vector<3x20xf32>
    %cst = arith.constant dense<0.000000e+00> : vector<8x20xf32>
    %3 = tpu.matmul %0, %2, %cst {dimension_numbers = #tpu.dot_dimension_numbers<[1], [0], [0], [1], [0, 0, 1, 1], [], []>} : vector<8x3xf32>, vector<3x20xf32>, vector<8x20xf32> -> vector<8x20xf32>
    %c0_5 = arith.constant 0 : index
    %c0_6 = arith.constant 0 : index
    %4 = vector.load %arg4[%c0_5, %c0_6] : memref<4x5xf32, #tpu.memory_space<vmem>>, vector<4x5xf32>
    %cst_7 = arith.constant dense<0.000000e+00> : vector<8x5xf32>
    %5 = tpu.matmul %1, %4, %cst_7 {dimension_numbers = #tpu.dot_dimension_numbers<[1], [0], [0], [1], [0, 0, 1, 1], [], []>} : vector<8x4xf32>, vector<4x5xf32>, vector<8x5xf32> -> vector<8x5xf32>
    %6 = vector.extract_strided_slice %3 {offsets = [0, 0], sizes = [8, 5], strides = [1, 1]} : vector<8x20xf32> to vector<8x5xf32>
    %7 = vector.extract_strided_slice %1 {offsets = [0, 0], sizes = [8, 1], strides = [1, 1]} : vector<8x4xf32> to vector<8x1xf32>
    %8 = vector.broadcast %7 : vector<8x1xf32> to vector<8x5xf32>
    %9 = arith.mulf %6, %8 : vector<8x5xf32>
    %10 = arith.addf %5, %9 : vector<8x5xf32>
    %11 = vector.extract_strided_slice %3 {offsets = [0, 5], sizes = [8, 5], strides = [1, 1]} : vector<8x20xf32> to vector<8x5xf32>
    %12 = vector.extract_strided_slice %1 {offsets = [0, 1], sizes = [8, 1], strides = [1, 1]} : vector<8x4xf32> to vector<8x1xf32>
    %13 = vector.broadcast %12 : vector<8x1xf32> to vector<8x5xf32>
    %14 = arith.mulf %11, %13 : vector<8x5xf32>
    %15 = arith.addf %10, %14 : vector<8x5xf32>
    %16 = vector.extract_strided_slice %3 {offsets = [0, 10], sizes = [8, 5], strides = [1, 1]} : vector<8x20xf32> to vector<8x5xf32>
    %17 = vector.extract_strided_slice %1 {offsets = [0, 2], sizes = [8, 1], strides = [1, 1]} : vector<8x4xf32> to vector<8x1xf32>
    %18 = vector.broadcast %17 : vector<8x1xf32> to vector<8x5xf32>
    %19 = arith.mulf %16, %18 : vector<8x5xf32>
    %20 = arith.addf %15, %19 : vector<8x5xf32>
    %21 = vector.extract_strided_slice %3 {offsets = [0, 15], sizes = [8, 5], strides = [1, 1]} : vector<8x20xf32> to vector<8x5xf32>
    %22 = vector.extract_strided_slice %1 {offsets = [0, 3], sizes = [8, 1], strides = [1, 1]} : vector<8x4xf32> to vector<8x1xf32>
    %23 = vector.broadcast %22 : vector<8x1xf32> to vector<8x5xf32>
    %24 = arith.mulf %21, %23 : vector<8x5xf32>
    %25 = arith.addf %20, %24 : vector<8x5xf32>
    %cst_8 = arith.constant 1.000000e+00 : f32
    %26 = vector.broadcast %cst_8 : f32 to vector<8x3xf32>
    %cst_9 = arith.constant 3.000000e+00 : f32
    %27 = vector.broadcast %cst_9 : f32 to vector<8x3xf32>
    %28 = arith.mulf %27, %0 : vector<8x3xf32>
    %29 = arith.mulf %28, %0 : vector<8x3xf32>
    %cst_10 = arith.constant 1.000000e+00 : f32
    %30 = vector.broadcast %cst_10 : f32 to vector<8x3xf32>
    %31 = arith.mulf %30, %26 : vector<8x3xf32>
    %32 = arith.subf %29, %31 : vector<8x3xf32>
    %cst_11 = arith.constant 2.000000e+00 : f32
    %33 = vector.broadcast %cst_11 : f32 to vector<8x3xf32>
    %34 = arith.divf %32, %33 : vector<8x3xf32>
    %35 = tpu.concatenate %26, %0, %34 in 1 : vector<8x3xf32>, vector<8x3xf32>, vector<8x3xf32> -> vector<8x9xf32>
    %c0_12 = arith.constant 0 : index
    %c0_13 = arith.constant 0 : index
    %c0_14 = arith.constant 0 : index
    %36 = vector.load %arg5[%c0_12, %c0_13, %c0_14] : memref<3x9x10xf32, #tpu.memory_space<vmem>>, vector<1x9x10xf32>
    %37 = vector.shape_cast %36 : vector<1x9x10xf32> to vector<9x10xf32>
    %cst_15 = arith.constant dense<0.000000e+00> : vector<8x10xf32>
    %38 = tpu.matmul %35, %37, %cst_15 {dimension_numbers = #tpu.dot_dimension_numbers<[1], [0], [0], [1], [0, 0, 1, 1], [], []>} : vector<8x9xf32>, vector<9x10xf32>, vector<8x10xf32> -> vector<8x10xf32>
    %c1 = arith.constant 1 : index
    %c0_16 = arith.constant 0 : index
    %c0_17 = arith.constant 0 : index
    %39 = vector.load %arg5[%c1, %c0_16, %c0_17] : memref<3x9x10xf32, #tpu.memory_space<vmem>>, vector<1x9x10xf32>
    %40 = vector.shape_cast %39 : vector<1x9x10xf32> to vector<9x10xf32>
    %cst_18 = arith.constant dense<0.000000e+00> : vector<8x10xf32>
    %41 = tpu.matmul %35, %40, %cst_18 {dimension_numbers = #tpu.dot_dimension_numbers<[1], [0], [0], [1], [0, 0, 1, 1], [], []>} : vector<8x9xf32>, vector<9x10xf32>, vector<8x10xf32> -> vector<8x10xf32>
    %42 = arith.mulf %38, %41 : vector<8x10xf32>
    %c2 = arith.constant 2 : index
    %c0_19 = arith.constant 0 : index
    %c0_20 = arith.constant 0 : index
    %43 = vector.load %arg5[%c2, %c0_19, %c0_20] : memref<3x9x10xf32, #tpu.memory_space<vmem>>, vector<1x9x10xf32>
    %44 = vector.shape_cast %43 : vector<1x9x10xf32> to vector<9x10xf32>
    %cst_21 = arith.constant dense<0.000000e+00> : vector<8x10xf32>
    %45 = tpu.matmul %35, %44, %cst_21 {dimension_numbers = #tpu.dot_dimension_numbers<[1], [0], [0], [1], [0, 0, 1, 1], [], []>} : vector<8x9xf32>, vector<9x10xf32>, vector<8x10xf32> -> vector<8x10xf32>
    %46 = arith.mulf %42, %45 : vector<8x10xf32>
    %c0_22 = arith.constant 0 : index
    %c0_23 = arith.constant 0 : index
    %47 = vector.load %arg6[%c0_22, %c0_23] : memref<10x5xf32, #tpu.memory_space<vmem>>, vector<10x5xf32>
    %cst_24 = arith.constant dense<0.000000e+00> : vector<8x5xf32>
    %48 = tpu.matmul %46, %47, %cst_24 {dimension_numbers = #tpu.dot_dimension_numbers<[1], [0], [0], [1], [0, 0, 1, 1], [], []>} : vector<8x10xf32>, vector<10x5xf32>, vector<8x5xf32> -> vector<8x5xf32>
    %49 = arith.addf %25, %48 : vector<8x5xf32>
    %c0_25 = arith.constant 0 : index
    %c0_26 = arith.constant 0 : index
    %50 = vector.load %arg7[%c0_25, %c0_26] : memref<8x5xf32, #tpu.memory_space<vmem>>, vector<8x5xf32>
    tpu.vector_store %arg7[%c0_25, %c0_26], %49 {strides = array<i32>} : memref<8x5xf32, #tpu.memory_space<vmem>>, vector<8x5xf32>,
    return
  }
  func.func @transform_0(%arg0: i32) -> (i32, i32) {
    %c0_i32 = arith.constant 0 : i32
    %c0_i32_0 = arith.constant 0 : i32
    return %arg0, %c0_i32 : i32, i32
  }
  func.func @transform_1(%arg0: i32) -> (i32, i32) {
    %c0_i32 = arith.constant 0 : i32
    %c0_i32_0 = arith.constant 0 : i32
    return %arg0, %c0_i32 : i32, i32
  }
  func.func @transform_2(%arg0: i32) -> (i32, i32) {
    %c0_i32 = arith.constant 0 : i32
    %c0_i32_0 = arith.constant 0 : i32
    %c0_i32_1 = arith.constant 0 : i32
    return %c0_i32, %c0_i32_0 : i32, i32
  }
  func.func @transform_3(%arg0: i32) -> (i32, i32) {
    %c0_i32 = arith.constant 0 : i32
    %c0_i32_0 = arith.constant 0 : i32
    %c0_i32_1 = arith.constant 0 : i32
    return %c0_i32, %c0_i32_0 : i32, i32
  }
  func.func @transform_4(%arg0: i32) -> (i32, i32, i32) {
    %c0_i32 = arith.constant 0 : i32
    %c0_i32_0 = arith.constant 0 : i32
    %c0_i32_1 = arith.constant 0 : i32
    %c0_i32_2 = arith.constant 0 : i32
    return %c0_i32, %c0_i32_0, %c0_i32_1 : i32, i32, i32
  }
  func.func @transform_5(%arg0: i32) -> (i32, i32) {
    %c0_i32 = arith.constant 0 : i32
    %c0_i32_0 = arith.constant 0 : i32
    %c0_i32_1 = arith.constant 0 : i32
    return %c0_i32, %c0_i32_0 : i32, i32
  }
  func.func @transform_6(%arg0: i32) -> (i32, i32) {
    %c0_i32 = arith.constant 0 : i32
    %c0_i32_0 = arith.constant 0 : i32
    return %arg0, %c0_i32 : i32, i32
  }
}

</mosaic_0001>

<llo_original>
// kernel: tpu_custom_call.1
$region0: #{tpu_custom_call.1}
  #allocation0 [shape = 'u32[]', space=smem, size = 0x4, offset = 0x4, fixed_abs, tag = 'smem constant byte address 0x4 - core index']
  #allocation1 [shape = 'u32[144,128]{1,0:T(1,128)}', space=vmem, size = 0x12000, scoped, tag = 'internal scratch']
  %s0 = inlined_call_operand.vmem [shape: f32[8,3], index: 0, kind: input, shape index: {}]
  %s1 = inlined_call_operand.vmem [shape: f32[8,4], index: 1, kind: input, shape index: {}]
  %s2 = inlined_call_operand.vmem [shape: f32[3,20], index: 2, kind: input, shape index: {}]
  %s3 = inlined_call_operand.vmem [shape: f32[4,5], index: 3, kind: input, shape index: {}]
  %s4 = inlined_call_operand.vmem [shape: f32[3,9,10], index: 4, kind: input, shape index: {}]
  %s5 = inlined_call_operand.vmem [shape: f32[10,5], index: 5, kind: input, shape index: {}]
  %s6 = inlined_call_operand.hbm [shape: f32[8,5], index: 6, kind: output, shape index: {}]
  %s7 = sld [smem:[#allocation0]]
  $region34: #{tpu_custom_call.1} parent=0
    _
  %s9 = ssub.s32 1, %s7
  %s10 = scalar_select 0, %s9, %s7
  $region1: #{tpu_custom_call.1} parent=0
    #allocation2 [shape = 'u8[4096]{0}', space=vmem, size = 0x1000, scoped, tag = 'output window, operand 0, single buffered']
    #allocation3 [shape = 's32[1]{0}', space=sflag, size = 0x4, scoped, tag = 'scoped memory for tpu_custom_call.1']
    %11 = vsyncpa [#allocation3], 0
    // Predicated region
    $region2: #{tpu_custom_call.1} parent=1 // pred_check
      _
    $region3: #{tpu_custom_call.1} parent=1 // pred_check_branch
      %13 = sbr.rel (0) target = $region5
    $region4: #{tpu_custom_call.1} parent=1 // pred_region
      _
    $region5: #{tpu_custom_call.1} parent=1 // pred_fallthru
      _
    // Predicated region
    $region6: #{tpu_custom_call.1} parent=1 // pred_check
      _
    $region7: #{tpu_custom_call.1} parent=1 // pred_check_branch
      %15 = sbr.rel (0) target = $region9
    $region8: #{tpu_custom_call.1} parent=1 // pred_region
      _
    $region9: #{tpu_custom_call.1} parent=1 // pred_fallthru
      _
    // Predicated region
    $region10: #{tpu_custom_call.1} parent=1 // pred_check
      _
    $region11: #{tpu_custom_call.1} parent=1 // pred_check_branch
      %17 = sbr.rel (0) target = $region13
    $region12: #{tpu_custom_call.1} parent=1 // pred_region
      _
    $region13: #{tpu_custom_call.1} parent=1 // pred_fallthru
      _
    // Predicated region
    $region14: #{tpu_custom_call.1} parent=1 // pred_check
      _
    $region15: #{tpu_custom_call.1} parent=1 // pred_check_branch
      %19 = sbr.rel (0) target = $region17
    $region16: #{tpu_custom_call.1} parent=1 // pred_region
      _
    $region17: #{tpu_custom_call.1} parent=1 // pred_fallthru
      _
    // Predicated region
    $region18: #{tpu_custom_call.1} parent=1 // pred_check
      _
    $region19: #{tpu_custom_call.1} parent=1 // pred_check_branch
      %21 = sbr.rel (0) target = $region21
    $region20: #{tpu_custom_call.1} parent=1 // pred_region
      _
    $region21: #{tpu_custom_call.1} parent=1 // pred_fallthru
      _
    // Predicated region
    $region22: #{tpu_custom_call.1} parent=1 // pred_check
      _
    $region23: #{tpu_custom_call.1} parent=1 // pred_check_branch
      %23 = sbr.rel (0) target = $region25
    $region24: #{tpu_custom_call.1} parent=1 // pred_region
      _
    $region25: #{tpu_custom_call.1} parent=1 // pred_fallthru
      _
    %v24 = vld [vmem:[%s0] sm:$0xff]
    %v25 = vld [vmem:[%s1] sm:$0xff]
    %v26 = vld [vmem:[%s2] sm:$0x7]
    %vm27 = vcmask 23552
    %v29 = vsel %vm27, %v24, 0
    %vm31 = vcmask 1042432
    %v33 = vsel %vm31, %v26, 0
    %35 = vmatprep.subr.mxu0 0.0
    %36 = vmatpush1.msra.mxu0 %v33
    %37 = vmatprep.subr.mxu0 0.0
    %38 = vmatpush1.msra.mxu0 0.0
    %39 = vmatprep.subr.mxu0 0.0
    %40 = vmatpush1.msra.mxu0 0.0
    %41 = vmatprep.subr.mxu0 0.0
    %42 = vmatpush1.msra.mxu0 0.0
    %43 = vmatprep.subr.mxu0 0.0
    %44 = vmatpush1.msra.mxu0 0.0
    %45 = vmatprep.subr.mxu0 0.0
    %46 = vmatpush1.msra.mxu0 0.0
    %47 = vmatprep.subr.mxu0 0.0
    %48 = vmatpush1.msra.mxu0 0.0
    %49 = vmatprep.subr.mxu0 0.0
    %50 = vmatpush1.msra.mxu0 0.0
    %51 = vmatprep.subr.mxu0 0.0
    %52 = vmatpush1.msra.mxu0 0.0
    %53 = vmatprep.subr.mxu0 0.0
    %54 = vmatpush1.msra.mxu0 0.0
    %55 = vmatprep.subr.mxu0 0.0
    %56 = vmatpush1.msra.mxu0 0.0
    %57 = vmatprep.subr.mxu0 0.0
    %58 = vmatpush1.msra.mxu0 0.0
    %59 = vmatprep.subr.mxu0 0.0
    %60 = vmatpush1.msra.mxu0 0.0
    %61 = vmatprep.subr.mxu0 0.0
    %62 = vmatpush1.msra.mxu0 0.0
    %63 = vmatprep.subr.mxu0 0.0
    %64 = vmatpush1.msra.mxu0 0.0
    %65 = vmatprep.subr.mxu0 0.0
    %66 = vmatpush1.msra.mxu0 0.0
    %67 = vmatprep.subr.mxu0 0.0
    %68 = vmatpush1.msra.mxu0 0.0
    %69 = vmatprep.subr.mxu0 0.0
    %70 = vmatpush1.msra.mxu0 0.0
    %71 = vmatprep.subr.mxu0 0.0
    %72 = vmatpush1.msra.mxu0 0.0
    %73 = vmatprep.subr.mxu0 0.0
    %74 = vmatpush1.msra.mxu0 0.0
    %75 = vmatprep.subr.mxu0 0.0
    %76 = vmatpush1.msra.mxu0 0.0
    %77 = vmatprep.subr.mxu0 0.0
    %78 = vmatpush1.msra.mxu0 0.0
    %79 = vmatprep.subr.mxu0 0.0
    %80 = vmatpush1.msra.mxu0 0.0
    %81 = vmatprep.subr.mxu0 0.0
    %82 = vmatpush1.msra.mxu0 0.0
    %83 = vmatprep.subr.mxu0 0.0
    %84 = vmatpush1.msra.mxu0 0.0
    %85 = vmatprep.subr.mxu0 0.0
    %86 = vmatpush1.msra.mxu0 0.0
    %87 = vmatprep.subr.mxu0 0.0
    %88 = vmatpush1.msra.mxu0 0.0
    %89 = vmatprep.subr.mxu0 0.0
    %90 = vmatpush1.msra.mxu0 0.0
    %91 = vmatprep.subr.mxu0 0.0
    %92 = vmatpush1.msra.mxu0 0.0
    %93 = vmatprep.subr.mxu0 0.0
    %94 = vmatpush1.msra.mxu0 0.0
    %95 = vmatprep.subr.mxu0 0.0
    %96 = vmatpush1.msra.mxu0 0.0
    %97 = vmatprep.subr.mxu0 0.0
    %98 = vmatpush1.msra.mxu0 0.0
    %99 = vmatprep.mubr.f32.mxu0 0.0
    %100 = vmatmul.mubr.f32.gmra.mrb[0].mxu0 %v29
    %v101 = vpop.f32.mrb[0].mxu0
    %v102 = vadd.f32 0.0, %v101
    %v103 = vpop.f32.mrb[0].mxu0
    %104 = vdwg.mxu0
    %v105 = vld [vmem:[%s3] sm:$0xf]
    %107 = vset.pattern.permute.xlu0 0
    %108 = vperm.xlu0 %107, %v25
    %v109 = vpop.permute.xlu0 %108
    %v111 = vmul.f32 %v102, %v109
    %vm112 = vcmask 31744
    %v113 = vsel %vm112, %v25, 0
    %vm115 = vcmask 1043456
    %v117 = vsel %vm115, %v105, 0
    %119 = vmatprep.subr.mxu0 0.0
    %120 = vmatpush1.msra.mxu0 %v117
    %121 = vmatprep.subr.mxu0 0.0
    %122 = vmatpush1.msra.mxu0 0.0
    %123 = vmatprep.subr.mxu0 0.0
    %124 = vmatpush1.msra.mxu0 0.0
    %125 = vmatprep.subr.mxu0 0.0
    %126 = vmatpush1.msra.mxu0 0.0
    %127 = vmatprep.subr.mxu0 0.0
    %128 = vmatpush1.msra.mxu0 0.0
    %129 = vmatprep.subr.mxu0 0.0
    %130 = vmatpush1.msra.mxu0 0.0
    %131 = vmatprep.subr.mxu0 0.0
    %132 = vmatpush1.msra.mxu0 0.0
    %133 = vmatprep.subr.mxu0 0.0
    %134 = vmatpush1.msra.mxu0 0.0
    %135 = vmatprep.subr.mxu0 0.0
    %136 = vmatpush1.msra.mxu0 0.0
    %137 = vmatprep.subr.mxu0 0.0
    %138 = vmatpush1.msra.mxu0 0.0
    %139 = vmatprep.subr.mxu0 0.0
    %140 = vmatpush1.msra.mxu0 0.0
    %141 = vmatprep.subr.mxu0 0.0
    %142 = vmatpush1.msra.mxu0 0.0
    %143 = vmatprep.subr.mxu0 0.0
    %144 = vmatpush1.msra.mxu0 0.0
    %145 = vmatprep.subr.mxu0 0.0
    %146 = vmatpush1.msra.mxu0 0.0
    %147 = vmatprep.subr.mxu0 0.0
    %148 = vmatpush1.msra.mxu0 0.0
    %149 = vmatprep.subr.mxu0 0.0
    %150 = vmatpush1.msra.mxu0 0.0
    %151 = vmatprep.subr.mxu0 0.0
    %152 = vmatpush1.msra.mxu0 0.0
    %153 = vmatprep.subr.mxu0 0.0
    %154 = vmatpush1.msra.mxu0 0.0
    %155 = vmatprep.subr.mxu0 0.0
    %156 = vmatpush1.msra.mxu0 0.0
    %157 = vmatprep.subr.mxu0 0.0
    %158 = vmatpush1.msra.mxu0 0.0
    %159 = vmatprep.subr.mxu0 0.0
    %160 = vmatpush1.msra.mxu0 0.0
    %161 = vmatprep.subr.mxu0 0.0
    %162 = vmatpush1.msra.mxu0 0.0
    %163 = vmatprep.subr.mxu0 0.0
    %164 = vmatpush1.msra.mxu0 0.0
    %165 = vmatprep.subr.mxu0 0.0
    %166 = vmatpush1.msra.mxu0 0.0
    %167 = vmatprep.subr.mxu0 0.0
    %168 = vmatpush1.msra.mxu0 0.0
    %169 = vmatprep.subr.mxu0 0.0
    %170 = vmatpush1.msra.mxu0 0.0
    %171 = vmatprep.subr.mxu0 0.0
    %172 = vmatpush1.msra.mxu0 0.0
    %173 = vmatprep.subr.mxu0 0.0
    %174 = vmatpush1.msra.mxu0 0.0
    %175 = vmatprep.subr.mxu0 0.0
    %176 = vmatpush1.msra.mxu0 0.0
    %177 = vmatprep.subr.mxu0 0.0
    %178 = vmatpush1.msra.mxu0 0.0
    %179 = vmatprep.subr.mxu0 0.0
    %180 = vmatpush1.msra.mxu0 0.0
    %181 = vmatprep.subr.mxu0 0.0
    %182 = vmatpush1.msra.mxu0 0.0
    %183 = vmatprep.mubr.f32.mxu0 0.0
    %184 = vmatmul.mubr.f32.gmra.mrb[0].mxu0 %v113
    %v185 = vpop.f32.mrb[0].mxu0
    %v186 = vadd.f32 %v111, %v185
    %v187 = vpop.f32.mrb[0].mxu0
    %188 = vdwg.mxu0
    %189 = vset.pattern.permute.xlu0 1
    %190 = vperm.xlu0 %189, %v25
    %v191 = vpop.permute.xlu0 %190
    %v193 = vmul.f32 %v102, %v191
    %195 = vrot.lane.b32.xlu0 %v193, 123
    %v196 = vpop.permute.xlu0 %195
    %v198 = vadd.f32 %v186, %v196
    %199 = vset.pattern.permute.xlu0 2
    %200 = vperm.xlu0 %199, %v25
    %v201 = vpop.permute.xlu0 %200
    %v203 = vmul.f32 %v102, %v201
    %205 = vrot.lane.b32.xlu0 %v203, 118
    %v206 = vpop.permute.xlu0 %205
    %v208 = vadd.f32 %v198, %v206
    %209 = vset.pattern.permute.xlu0 3
    %210 = vperm.xlu0 %209, %v25
    %v211 = vpop.permute.xlu0 %210
    %v213 = vmul.f32 %v102, %v211
    %215 = vrot.lane.b32.xlu0 %v213, 113
    %v216 = vpop.permute.xlu0 %215
    %v218 = vadd.f32 %v208, %v216
    %v219 = vmul.f32 %v24, 3.0
    %v220 = vmul.f32 %v219, %v24
    %v221 = vsub.f32 %v220, 1.0
    %v222 = vrcp.pop 2.0
    %v223 = vmul.f32 %v221, %v222
    %224 = vrot.lane.b32.xlu0 %v24, 3
    %v225 = vpop.permute.xlu0 %224
    %228 = vrot.lane.b32.xlu0 %v223, 6
    %v229 = vpop.permute.xlu0 %228
    %v231 = vsel %vm27, 1.0, %v225
    %vm232 = vcmask 48128
    %v233 = vsel %vm232, %v231, %v229
    %v234 = vld [vmem:[%s4] sm:$0xff]
    %v235 = vld [vmem:[%s4 + $0x8] sm:$0x1]
    %vm236 = vcmask 72704
    %v238 = vsel %vm236, %v233, 0
    %vm240 = vcmask 1040384
    %v242 = vsel %vm240, %v235, 0
    %244 = vmatprep.subr.mxu0 0.0
    %245 = vmatpush1.msra.mxu0 %v234
    %246 = vmatprep.subr.mxu0 0.0
    %247 = vmatpush1.msra.mxu0 %v242
    %248 = vmatprep.subr.mxu0 0.0
    %249 = vmatpush1.msra.mxu0 0.0
    %250 = vmatprep.subr.mxu0 0.0
    %251 = vmatpush1.msra.mxu0 0.0
    %252 = vmatprep.subr.mxu0 0.0
    %253 = vmatpush1.msra.mxu0 0.0
    %254 = vmatprep.subr.mxu0 0.0
    %255 = vmatpush1.msra.mxu0 0.0
    %256 = vmatprep.subr.mxu0 0.0
    %257 = vmatpush1.msra.mxu0 0.0
    %258 = vmatprep.subr.mxu0 0.0
    %259 = vmatpush1.msra.mxu0 0.0
    %260 = vmatprep.subr.mxu0 0.0
    %261 = vmatpush1.msra.mxu0 0.0
    %262 = vmatprep.subr.mxu0 0.0
    %263 = vmatpush1.msra.mxu0 0.0
    %264 = vmatprep.subr.mxu0 0.0
    %265 = vmatpush1.msra.mxu0 0.0
    %266 = vmatprep.subr.mxu0 0.0
    %267 = vmatpush1.msra.mxu0 0.0
    %268 = vmatprep.subr.mxu0 0.0
    %269 = vmatpush1.msra.mxu0 0.0
    %270 = vmatprep.subr.mxu0 0.0
    %271 = vmatpush1.msra.mxu0 0.0
    %272 = vmatprep.subr.mxu0 0.0
    %273 = vmatpush1.msra.mxu0 0.0
    %274 = vmatprep.subr.mxu0 0.0
    %275 = vmatpush1.msra.mxu0 0.0
    %276 = vmatprep.subr.mxu0 0.0
    %277 = vmatpush1.msra.mxu0 0.0
    %278 = vmatprep.subr.mxu0 0.0
    %279 = vmatpush1.msra.mxu0 0.0
    %280 = vmatprep.subr.mxu0 0.0
    %281 = vmatpush1.msra.mxu0 0.0
    %282 = vmatprep.subr.mxu0 0.0
    %283 = vmatpush1.msra.mxu0 0.0
    %284 = vmatprep.subr.mxu0 0.0
    %285 = vmatpush1.msra.mxu0 0.0
    %286 = vmatprep.subr.mxu0 0.0
    %287 = vmatpush1.msra.mxu0 0.0
    %288 = vmatprep.subr.mxu0 0.0
    %289 = vmatpush1.msra.mxu0 0.0
    %290 = vmatprep.subr.mxu0 0.0
    %291 = vmatpush1.msra.mxu0 0.0
    %292 = vmatprep.subr.mxu0 0.0
    %293 = vmatpush1.msra.mxu0 0.0
    %294 = vmatprep.subr.mxu0 0.0
    %295 = vmatpush1.msra.mxu0 0.0
    %296 = vmatprep.subr.mxu0 0.0
    %297 = vmatpush1.msra.mxu0 0.0
    %298 = vmatprep.subr.mxu0 0.0
    %299 = vmatpush1.msra.mxu0 0.0
    %300 = vmatprep.subr.mxu0 0.0
    %301 = vmatpush1.msra.mxu0 0.0
    %302 = vmatprep.subr.mxu0 0.0
    %303 = vmatpush1.msra.mxu0 0.0
    %304 = vmatprep.subr.mxu0 0.0
    %305 = vmatpush1.msra.mxu0 0.0
    %306 = vmatprep.subr.mxu0 0.0
    %307 = vmatpush1.msra.mxu0 0.0
    %308 = vmatprep.mubr.f32.mxu0 0.0
    %309 = vmatmul.mubr.f32.gmra.mrb[0].mxu0 %v238
    %v310 = vpop.f32.mrb[0].mxu0
    %v311 = vadd.f32 0.0, %v310
    %v312 = vpop.f32.mrb[0].mxu0
    %313 = vdwg.mxu0
    %s314 = scalar_lea.vmem %s4, 16
    %v315 = vld [vmem:[%s314] sm:$0xff]
    %v316 = vld [vmem:[%s314 + $0x8] sm:$0x1]
    %v318 = vsel %vm240, %v316, 0
    %320 = vmatprep.subr.mxu0 0.0
    %321 = vmatpush1.msra.mxu0 %v315
    %322 = vmatprep.subr.mxu0 0.0
    %323 = vmatpush1.msra.mxu0 %v318
    %324 = vmatprep.subr.mxu0 0.0
    %325 = vmatpush1.msra.mxu0 0.0
    %326 = vmatprep.subr.mxu0 0.0
    %327 = vmatpush1.msra.mxu0 0.0
    %328 = vmatprep.subr.mxu0 0.0
    %329 = vmatpush1.msra.mxu0 0.0
    %330 = vmatprep.subr.mxu0 0.0
    %331 = vmatpush1.msra.mxu0 0.0
    %332 = vmatprep.subr.mxu0 0.0
    %333 = vmatpush1.msra.mxu0 0.0
    %334 = vmatprep.subr.mxu0 0.0
    %335 = vmatpush1.msra.mxu0 0.0
    %336 = vmatprep.subr.mxu0 0.0
    %337 = vmatpush1.msra.mxu0 0.0
    %338 = vmatprep.subr.mxu0 0.0
    %339 = vmatpush1.msra.mxu0 0.0
    %340 = vmatprep.subr.mxu0 0.0
    %341 = vmatpush1.msra.mxu0 0.0
    %342 = vmatprep.subr.mxu0 0.0
    %343 = vmatpush1.msra.mxu0 0.0
    %344 = vmatprep.subr.mxu0 0.0
    %345 = vmatpush1.msra.mxu0 0.0
    %346 = vmatprep.subr.mxu0 0.0
    %347 = vmatpush1.msra.mxu0 0.0
    %348 = vmatprep.subr.mxu0 0.0
    %349 = vmatpush1.msra.mxu0 0.0
    %350 = vmatprep.subr.mxu0 0.0
    %351 = vmatpush1.msra.mxu0 0.0
    %352 = vmatprep.subr.mxu0 0.0
    %353 = vmatpush1.msra.mxu0 0.0
    %354 = vmatprep.subr.mxu0 0.0
    %355 = vmatpush1.msra.mxu0 0.0
    %356 = vmatprep.subr.mxu0 0.0
    %357 = vmatpush1.msra.mxu0 0.0
    %358 = vmatprep.subr.mxu0 0.0
    %359 = vmatpush1.msra.mxu0 0.0
    %360 = vmatprep.subr.mxu0 0.0
    %361 = vmatpush1.msra.mxu0 0.0
    %362 = vmatprep.subr.mxu0 0.0
    %363 = vmatpush1.msra.mxu0 0.0
    %364 = vmatprep.subr.mxu0 0.0
    %365 = vmatpush1.msra.mxu0 0.0
    %366 = vmatprep.subr.mxu0 0.0
    %367 = vmatpush1.msra.mxu0 0.0
    %368 = vmatprep.subr.mxu0 0.0
    %369 = vmatpush1.msra.mxu0 0.0
    %370 = vmatprep.subr.mxu0 0.0
    %371 = vmatpush1.msra.mxu0 0.0
    %372 = vmatprep.subr.mxu0 0.0
    %373 = vmatpush1.msra.mxu0 0.0
    %374 = vmatprep.subr.mxu0 0.0
    %375 = vmatpush1.msra.mxu0 0.0
    %376 = vmatprep.subr.mxu0 0.0
    %377 = vmatpush1.msra.mxu0 0.0
    %378 = vmatprep.subr.mxu0 0.0
    %379 = vmatpush1.msra.mxu0 0.0
    %380 = vmatprep.subr.mxu0 0.0
    %381 = vmatpush1.msra.mxu0 0.0
    %382 = vmatprep.subr.mxu0 0.0
    %383 = vmatpush1.msra.mxu0 0.0
    %384 = vmatprep.mubr.f32.mxu0 0.0
    %385 = vmatmul.mubr.f32.gmra.mrb[0].mxu0 %v238
    %v386 = vpop.f32.mrb[0].mxu0
    %v387 = vadd.f32 0.0, %v386
    %v388 = vpop.f32.mrb[0].mxu0
    %389 = vdwg.mxu0
    %v390 = vmul.f32 %v311, %v387
    %s391 = scalar_lea.vmem %s4, 32
    %v392 = vld [vmem:[%s391] sm:$0xff]
    %v393 = vld [vmem:[%s391 + $0x8] sm:$0x1]
    %v395 = vsel %vm240, %v393, 0
    %397 = vmatprep.subr.mxu0 0.0
    %398 = vmatpush1.msra.mxu0 %v392
    %399 = vmatprep.subr.mxu0 0.0
    %400 = vmatpush1.msra.mxu0 %v395
    %401 = vmatprep.subr.mxu0 0.0
    %402 = vmatpush1.msra.mxu0 0.0
    %403 = vmatprep.subr.mxu0 0.0
    %404 = vmatpush1.msra.mxu0 0.0
    %405 = vmatprep.subr.mxu0 0.0
    %406 = vmatpush1.msra.mxu0 0.0
    %407 = vmatprep.subr.mxu0 0.0
    %408 = vmatpush1.msra.mxu0 0.0
    %409 = vmatprep.subr.mxu0 0.0
    %410 = vmatpush1.msra.mxu0 0.0
    %411 = vmatprep.subr.mxu0 0.0
    %412 = vmatpush1.msra.mxu0 0.0
    %413 = vmatprep.subr.mxu0 0.0
    %414 = vmatpush1.msra.mxu0 0.0
    %415 = vmatprep.subr.mxu0 0.0
    %416 = vmatpush1.msra.mxu0 0.0
    %417 = vmatprep.subr.mxu0 0.0
    %418 = vmatpush1.msra.mxu0 0.0
    %419 = vmatprep.subr.mxu0 0.0
    %420 = vmatpush1.msra.mxu0 0.0
    %421 = vmatprep.subr.mxu0 0.0
    %422 = vmatpush1.msra.mxu0 0.0
    %423 = vmatprep.subr.mxu0 0.0
    %424 = vmatpush1.msra.mxu0 0.0
    %425 = vmatprep.subr.mxu0 0.0
    %426 = vmatpush1.msra.mxu0 0.0
    %427 = vmatprep.subr.mxu0 0.0
    %428 = vmatpush1.msra.mxu0 0.0
    %429 = vmatprep.subr.mxu0 0.0
    %430 = vmatpush1.msra.mxu0 0.0
    %431 = vmatprep.subr.mxu0 0.0
    %432 = vmatpush1.msra.mxu0 0.0
    %433 = vmatprep.subr.mxu0 0.0
    %434 = vmatpush1.msra.mxu0 0.0
    %435 = vmatprep.subr.mxu0 0.0
    %436 = vmatpush1.msra.mxu0 0.0
    %437 = vmatprep.subr.mxu0 0.0
    %438 = vmatpush1.msra.mxu0 0.0
    %439 = vmatprep.subr.mxu0 0.0
    %440 = vmatpush1.msra.mxu0 0.0
    %441 = vmatprep.subr.mxu0 0.0
    %442 = vmatpush1.msra.mxu0 0.0
    %443 = vmatprep.subr.mxu0 0.0
    %444 = vmatpush1.msra.mxu0 0.0
    %445 = vmatprep.subr.mxu0 0.0
    %446 = vmatpush1.msra.mxu0 0.0
    %447 = vmatprep.subr.mxu0 0.0
    %448 = vmatpush1.msra.mxu0 0.0
    %449 = vmatprep.subr.mxu0 0.0
    %450 = vmatpush1.msra.mxu0 0.0
    %451 = vmatprep.subr.mxu0 0.0
    %452 = vmatpush1.msra.mxu0 0.0
    %453 = vmatprep.subr.mxu0 0.0
    %454 = vmatpush1.msra.mxu0 0.0
    %455 = vmatprep.subr.mxu0 0.0
    %456 = vmatpush1.msra.mxu0 0.0
    %457 = vmatprep.subr.mxu0 0.0
    %458 = vmatpush1.msra.mxu0 0.0
    %459 = vmatprep.subr.mxu0 0.0
    %460 = vmatpush1.msra.mxu0 0.0
    %461 = vmatprep.mubr.f32.mxu0 0.0
    %462 = vmatmul.mubr.f32.gmra.mrb[0].mxu0 %v238
    %v463 = vpop.f32.mrb[0].mxu0
    %v464 = vadd.f32 0.0, %v463
    %v465 = vpop.f32.mrb[0].mxu0
    %466 = vdwg.mxu0
    %v467 = vmul.f32 %v390, %v464
    %v468 = vld [vmem:[%s5] sm:$0xff]
    %v469 = vld [vmem:[%s5 + $0x8] sm:$0x3]
    %vm470 = vcmask 80896
    %v472 = vsel %vm470, %v467, 0
    %vm474 = vcmask 1041408
    %v476 = vsel %vm474, %v469, 0
    %478 = vmatprep.subr.mxu0 0.0
    %479 = vmatpush1.msra.mxu0 %v468
    %480 = vmatprep.subr.mxu0 0.0
    %481 = vmatpush1.msra.mxu0 %v476
    %482 = vmatprep.subr.mxu0 0.0
    %483 = vmatpush1.msra.mxu0 0.0
    %484 = vmatprep.subr.mxu0 0.0
    %485 = vmatpush1.msra.mxu0 0.0
    %486 = vmatprep.subr.mxu0 0.0
    %487 = vmatpush1.msra.mxu0 0.0
    %488 = vmatprep.subr.mxu0 0.0
    %489 = vmatpush1.msra.mxu0 0.0
    %490 = vmatprep.subr.mxu0 0.0
    %491 = vmatpush1.msra.mxu0 0.0
    %492 = vmatprep.subr.mxu0 0.0
    %493 = vmatpush1.msra.mxu0 0.0
    %494 = vmatprep.subr.mxu0 0.0
    %495 = vmatpush1.msra.mxu0 0.0
    %496 = vmatprep.subr.mxu0 0.0
    %497 = vmatpush1.msra.mxu0 0.0
    %498 = vmatprep.subr.mxu0 0.0
    %499 = vmatpush1.msra.mxu0 0.0
    %500 = vmatprep.subr.mxu0 0.0
    %501 = vmatpush1.msra.mxu0 0.0
    %502 = vmatprep.subr.mxu0 0.0
    %503 = vmatpush1.msra.mxu0 0.0
    %504 = vmatprep.subr.mxu0 0.0
    %505 = vmatpush1.msra.mxu0 0.0
    %506 = vmatprep.subr.mxu0 0.0
    %507 = vmatpush1.msra.mxu0 0.0
    %508 = vmatprep.subr.mxu0 0.0
    %509 = vmatpush1.msra.mxu0 0.0
    %510 = vmatprep.subr.mxu0 0.0
    %511 = vmatpush1.msra.mxu0 0.0
    %512 = vmatprep.subr.mxu0 0.0
    %513 = vmatpush1.msra.mxu0 0.0
    %514 = vmatprep.subr.mxu0 0.0
    %515 = vmatpush1.msra.mxu0 0.0
    %516 = vmatprep.subr.mxu0 0.0
    %517 = vmatpush1.msra.mxu0 0.0
    %518 = vmatprep.subr.mxu0 0.0
    %519 = vmatpush1.msra.mxu0 0.0
    %520 = vmatprep.subr.mxu0 0.0
    %521 = vmatpush1.msra.mxu0 0.0
    %522 = vmatprep.subr.mxu0 0.0
    %523 = vmatpush1.msra.mxu0 0.0
    %524 = vmatprep.subr.mxu0 0.0
    %525 = vmatpush1.msra.mxu0 0.0
    %526 = vmatprep.subr.mxu0 0.0
    %527 = vmatpush1.msra.mxu0 0.0
    %528 = vmatprep.subr.mxu0 0.0
    %529 = vmatpush1.msra.mxu0 0.0
    %530 = vmatprep.subr.mxu0 0.0
    %531 = vmatpush1.msra.mxu0 0.0
    %532 = vmatprep.subr.mxu0 0.0
    %533 = vmatpush1.msra.mxu0 0.0
    %534 = vmatprep.subr.mxu0 0.0
    %535 = vmatpush1.msra.mxu0 0.0
    %536 = vmatprep.subr.mxu0 0.0
    %537 = vmatpush1.msra.mxu0 0.0
    %538 = vmatprep.subr.mxu0 0.0
    %539 = vmatpush1.msra.mxu0 0.0
    %540 = vmatprep.subr.mxu0 0.0
    %541 = vmatpush1.msra.mxu0 0.0
    %542 = vmatprep.mubr.f32.mxu0 0.0
    %543 = vmatmul.mubr.f32.gmra.mrb[0].mxu0 %v472
    %v544 = vpop.f32.mrb[0].mxu0
    %v545 = vadd.f32 0.0, %v544
    %v546 = vpop.f32.mrb[0].mxu0
    %547 = vdwg.mxu0
    %v548 = vadd.f32 %v218, %v545
    %vm549 = vcmask 39936
    %550 = vst.msk [vmem:[#allocation2] sm:$0xff] %vm549, %v548
    // Predicated region
    $region26: #{tpu_custom_call.1} parent=1 // pred_check
      _
    $region27: #{tpu_custom_call.1} parent=1 // pred_check_branch
      %552 = sbr.rel (0) target = $region29
    $region28: #{tpu_custom_call.1} parent=1 // pred_region
      %s554 = ssub.s32 128, 128
      %555 = vsyncadd [#allocation3], %s554
      %s557 = sshll.u32 [#allocation2], 4
      %s558 = int_to_ptr.vmem [resolvable:$true] %s557
      %560 = dma.vmem_to_hbm [thread:$0]  %s558, 128, %s6, [#allocation3]
    $region29: #{tpu_custom_call.1} parent=1 // pred_fallthru
      _
    // Predicated region
    $region30: #{tpu_custom_call.1} parent=1 // pred_check
      _
    $region31: #{tpu_custom_call.1} parent=1 // pred_check_branch
      %562 = sbr.rel (0) target = $region33
    $region32: #{tpu_custom_call.1} parent=1 // pred_region
      %563 = dma.done [#allocation3], 128
    $region33: #{tpu_custom_call.1} parent=1 // pred_fallthru
      _
    %564 = vsyncpa [#allocation3], 1

</llo_original>
